<compile_context>
chip_gen: v7x
topology: tpu7x:2x2x1
jax: 0.10.0
libtpu: 0.0.40
codegen_flags: <defaults>
</compile_context>

<pallas_src>
import jax
import jax.numpy as jnp
import numpy as np
from jax.experimental import pallas as pl
from jax.experimental.pallas import tpu as pltpu


def _round_up(x, m):
    return (x + m - 1) // m * m


def _pick_tile(B, block_rows):
    """Rows per grid step.

    * B <= 256: whole batch in one step (splitting is pure ~0.35us/step
      overhead and megacore has nothing useful to shard at that size).
    * otherwise: >= 2 steps so ("parallel",) grid semantics can shard across
      both v7x TensorCores, capped at block_rows.  The tile is a multiple of
      128 so the transposed (dim, tile) output block is lane-dense and the x
      block's sublane dim stays 8-aligned.
    """
    if B <= 256:
        return B
    half = _round_up(pl.cdiv(B, 2), 128)
    return min(_round_up(block_rows, 128), half)


def _vmem_budget(tm, in_dim, dim):
    """Scoped-VMEM budget from the actual footprint (~4x headroom for the
    kernel-internal f32 temporaries), clamped to sane bounds."""
    bytes_per_el = 4  # conservative (f32) even on the bf16 path
    tile_bytes = bytes_per_el * (
        2 * tm * in_dim      # double-buffered x tile
        + 2 * dim * tm       # double-buffered (transposed) out tile
        + 2 * in_dim * dim   # weight (constant block, still double-buffered)
    )
    mib = 1 << 20
    return int(min(64 * mib, max(4 * mib, _round_up(4 * tile_bytes, mib))))


def mixer_kernel(x_ref, wt_ref, ot_ref):
    # Single fused MXU GEMM in transposed form:
    #   yt[d, b] = sum_k w123[k, d] * x[b, k]
    # expressed as wt (dim, K) contracted with x (tile, K) over their last
    # dims (the classic "A @ B^T" pattern), so the result is already in the
    # lane-dense (dim, tile_rows) layout -> no in-kernel transpose and no
    # masked stores on writeback.  f32 accumulation via preferred_element_type.
    yt = jax.lax.dot_general(
        wt_ref[...], x_ref[...],
        dimension_numbers=(((1,), (1,)), ((), ())),
        preferred_element_type=jnp.float32,
    )
    # F.normalize(., p=2, dim=1): per batch column here: y / max(||y||_2, 1e-12)
    sq = jnp.sum(yt * yt, axis=0, keepdims=True)          # (1, tile_rows)
    inv = jax.lax.rsqrt(jnp.maximum(sq, 1e-24))           # == 1 / max(sqrt(sq), 1e-12)
    ot_ref[...] = (yt * inv).astype(ot_ref.dtype)


def _mixer_pallas_t(x, w_t, *, block_rows, out_dtype):
    """Returns the lane-dense transposed result of shape (dim, B)."""
    B, in_dim = x.shape
    dim = w_t.shape[0]

    tm = _pick_tile(B, block_rows)
    grid = (pl.cdiv(B, tm),)

    return pl.pallas_call(
        mixer_kernel,
        out_shape=jax.ShapeDtypeStruct((dim, B), out_dtype),
        grid_spec=pltpu.PrefetchScalarGridSpec(
            num_scalar_prefetch=0,
            grid=grid,
            in_specs=[
                # Activation tile marches over the batch (double-buffered).
                pl.BlockSpec((tm, in_dim), lambda i: (i, 0)),
                # Collapsed, pre-transposed weight: constant index_map ->
                # fetched once and kept VMEM-resident across all grid steps.
                pl.BlockSpec((dim, in_dim), lambda i: (0, 0)),
            ],
            # Lane-dense output block: last dim tm is a multiple of 128 (or
            # equals B for the tiny single-step path).
            out_specs=pl.BlockSpec((dim, tm), lambda i: (0, i)),
        ),
        compiler_params=pltpu.CompilerParams(
            # Batch steps are independent -> megacore sharding on v7x,
            # harmless on single-TC v5e/v6e.
            dimension_semantics=("parallel",),
            vmem_limit_bytes=_vmem_budget(tm, in_dim, dim),
        ),
    )(x, w_t)


def make_mixer(w1, w2, w3, *, block_rows=2048, use_bf16=False):
    """Build a jitted Mixer forward.  The fc1@fc2@fc3 chain is collapsed and
    (pre-)transposed exactly once here, so per-call work is one pallas_call
    (+ a tiny transpose) under a single jit dispatch."""
    out_dtype = w1.dtype
    compute_dtype = jnp.bfloat16 if use_bf16 else w1.dtype

    # Collapse the weight chain once (dim^3 flops), mathematically identical
    # to applying the three matmuls in sequence; store transposed (dim, 2*dim)
    # as the LHS of the in-kernel A @ B^T GEMM.
    w123_t = jax.block_until_ready(
        jnp.dot(w1, jnp.dot(w2, w3)).T.astype(compute_dtype))

    @jax.jit
    def forward(x):
        out_t = _mixer_pallas_t(x.astype(compute_dtype), w123_t,
                                block_rows=block_rows, out_dtype=out_dtype)
        # Restore the module's (B, dim) layout. Cheap XLA op under jit;
        # downstream consumers that accept (dim, B) can skip it.
        return out_t.T

    return forward


def mixer_forward(x, w1, w2, w3, *, block_rows=2048, use_bf16=False):
    """One-shot convenience wrapper. Prefer make_mixer() when the weights are
    static across calls (the weight collapse is then hoisted out entirely)."""
    return make_mixer(w1, w2, w3, block_rows=block_rows, use_bf16=use_bf16)(x)


def xavier_normal(key, shape):
    # torch.nn.init.xavier_normal_ on a 2D param: std = sqrt(2/(fan_in+fan_out))
    d0, d1 = shape
    std = np.sqrt(2.0 / (d0 + d1))
    return jax.random.normal(key, shape, dtype=jnp.float32) * std


def reference_forward(x, w1, w2, w3):
    # Same op order as the PyTorch module (F.normalize(p=2, dim=1, eps=1e-12)).
    y = ((x @ w1) @ w2) @ w3
    norm = jnp.sqrt(jnp.sum(y * y, axis=1, keepdims=True))
    return y / jnp.maximum(norm, 1e-12)


if __name__ == "__main__":
    dim = 32  # hidden size of the Mixer

    key = jax.random.PRNGKey(0)
    kx, k1, k2, k3 = jax.random.split(key, 4)

    # Parameter shapes match the module: fc1 (2*dim, dim), fc2/fc3 (dim, dim).
    w1 = xavier_normal(k1, (2 * dim, dim))
    w2 = xavier_normal(k2, (dim, dim))
    w3 = xavier_normal(k3, (dim, dim))

    forward = make_mixer(w1, w2, w3)  # weights collapsed/hoisted once

    # B=1024 -> two 512-row grid steps (megacore-shardable, lane-dense blocks);
    # B=300  -> remainder tile (masked writeback on the partial block);
    # B=8    -> tiny single-step path.
    for batch in (1024, 300, 8):
        x = jax.random.normal(jax.random.fold_in(kx, batch),
                              (batch, 2 * dim), dtype=jnp.float32)
        out = jax.block_until_ready(forward(x))
        ref = jax.block_until_ready(reference_forward(x, w1, w2, w3))
        # Slightly looser than 1e-5 purely for the (benign) fp32 reassociation
        # of the collapsed weight chain; semantics are identical.
        np.testing.assert_allclose(np.asarray(out), np.asarray(ref),
                                   rtol=2e-5, atol=2e-5)

    print("KERNEL_OK")
</pallas_src>

<mosaic_0001>
module attributes {stable_mosaic.version = 11 : i64} {
  func.func @mixer_kernel(%arg0: i32, %arg1: memref<512x64xf32, #tpu.memory_space<vmem>>, %arg2: memref<32x64xf32, #tpu.memory_space<vmem>>, %arg3: memref<32x512xf32, #tpu.memory_space<vmem>>) attributes {dimension_semantics = [#tpu.dimension_semantics<parallel>], iteration_bounds = array<i64: 2>, scalar_prefetch = 0 : i64, scratch_operands = 0 : i64, tpu.core_type = #tpu.core_type<tc>, window_params = [{transform_indices = @transform_0, window_bounds = array<i64: 512, 64>}, {pipeline_mode = #tpu.pipeline_mode<synchronous>, transform_indices = @transform_1, window_bounds = array<i64: 32, 64>}, {transform_indices = @transform_2, window_bounds = array<i64: 32, 512>}]} {
    %c0 = arith.constant 0 : index
    %c0_0 = arith.constant 0 : index
    %0 = vector.load %arg2[%c0, %c0_0] : memref<32x64xf32, #tpu.memory_space<vmem>>, vector<32x64xf32>
    %c0_1 = arith.constant 0 : index
    %c0_2 = arith.constant 0 : index
    %1 = vector.load %arg1[%c0_1, %c0_2] : memref<512x64xf32, #tpu.memory_space<vmem>>, vector<512x64xf32>
    %cst = arith.constant dense<0.000000e+00> : vector<32x512xf32>
    %2 = tpu.matmul %0, %1, %cst {dimension_numbers = #tpu.dot_dimension_numbers<[1], [1], [0], [0], [0, 0, 1, 0], [], []>} : vector<32x64xf32>, vector<512x64xf32>, vector<32x512xf32> -> vector<32x512xf32>
    %3 = arith.mulf %2, %2 : vector<32x512xf32>
    %cst_3 = arith.constant dense<0.000000e+00> : vector<512xf32>
    %4 = vector.multi_reduction <add>, %3, %cst_3 [0] : vector<32x512xf32> to vector<512xf32>
    %5 = vector.shape_cast %4 : vector<512xf32> to vector<1x512xf32>
    %cst_4 = arith.constant 1.000000e-24 : f32
    %6 = vector.broadcast %cst_4 : f32 to vector<1x512xf32>
    %7 = arith.maximumf %5, %6 : vector<1x512xf32>
    %8 = math.rsqrt %7 : vector<1x512xf32>
    %9 = vector.broadcast %8 : vector<1x512xf32> to vector<32x512xf32>
    %10 = arith.mulf %2, %9 : vector<32x512xf32>
    %c0_5 = arith.constant 0 : index
    %c0_6 = arith.constant 0 : index
    %11 = vector.load %arg3[%c0_5, %c0_6] : memref<32x512xf32, #tpu.memory_space<vmem>>, vector<32x512xf32>
    tpu.vector_store %arg3[%c0_5, %c0_6], %10 {strides = array<i32>} : memref<32x512xf32, #tpu.memory_space<vmem>>, vector<32x512xf32>,
    return
  }
  func.func @transform_0(%arg0: i32) -> (i32, i32) {
    %c0_i32 = arith.constant 0 : i32
    %c0_i32_0 = arith.constant 0 : i32
    return %arg0, %c0_i32 : i32, i32
  }
  func.func @transform_1(%arg0: i32) -> (i32, i32) {
    %c0_i32 = arith.constant 0 : i32
    %c0_i32_0 = arith.constant 0 : i32
    %c0_i32_1 = arith.constant 0 : i32
    return %c0_i32, %c0_i32_0 : i32, i32
  }
  func.func @transform_2(%arg0: i32) -> (i32, i32) {
    %c0_i32 = arith.constant 0 : i32
    %c0_i32_0 = arith.constant 0 : i32
    return %c0_i32, %arg0 : i32, i32
  }
}

</mosaic_0001>

<llo_original>
// kernel: forward.1
$region0: #{forward.1}
  #allocation0 [shape = 'u32[]', space=smem, size = 0x4, offset = 0x4, fixed_abs, tag = 'smem constant byte address 0x4 - core index']
  #allocation1 [shape = 'u32[144,128]{1,0:T(1,128)}', space=vmem, size = 0x12000, scoped, tag = 'internal scratch']
  %s0 = inlined_call_operand.vmem [shape: f32[1024,64], index: 0, kind: input, shape index: {}]
  %s1 = inlined_call_operand.vmem [shape: f32[32,64], index: 1, kind: input, shape index: {}]
  %s2 = inlined_call_operand.hbm [shape: f32[32,1024], index: 2, kind: output, shape index: {}]
  %s3 = sld [smem:[#allocation0]]
  $region41: #{forward.1} parent=0
    _
  %s5 = ssub.s32 1, %s3
  %s6 = scalar_select 0, %s5, %s3
  $region1: #{forward.1} parent=0
    #allocation2 [shape = 'u8[131072]{0}', space=vmem, size = 0x20000, scoped, tag = 'output window, operand 0']
    #allocation3 [shape = 's32[2]{0}', space=sflag, size = 0x8, scoped, tag = 'scoped memory for forward.1']
    %7 = vsyncpa [#allocation3], 0
    %s8 = scalar_lea.sflag [#allocation3], 1
    %9 = vsyncpa %s8, 0
    loop: start=0, step=1, limit=4
    $region2: #{forward.1} parent=1 // loop_pre_header
      _
    $region3: #{forward.1} parent=1 // loop_header
      %s11 = sphi 0, %s15
      %p12 = scmp.ge.s32.totalorder %s11, 4
      %s21 = sphi 0, %s23
      %s24 = sphi 0, %s21
      %s25 = sphi 0, %s24
      %s41 = sphi 0, %s25
      %s45 = sphi 0, %s45
      %s47 = sphi 0, %s45
      %s48 = sphi 0, %s47
      %s62 = sphi 0, %s48
      %s68 = sphi 0, %s70
      %s71 = sphi 0, %s68
      %s72 = sphi 0, %s71
      %s88 = sphi 0, %s72
    $region4: #{forward.1} parent=1 // loop_header_branch
      %14 = sbr.rel (%p12) target = $region8
    $region5: #{forward.1} parent=1 // loop_body
      %s16 = ssub.s32 %s11, 1
      %s17 = ssub.s32 %s11, 2
      %s18 = sadd.s32 %s11, 1
      %s19 = ssub.s32 %s11, %s18
      %p20 = scmp.eq.s32.totalorder %s19, 0
      %s22 = sadd.s32 %s21, 1
      %s23 = scalar_select %p20, %s21, %s22
      %p26 = pneg %p20
      %p27 = scmp.eq.s32.totalorder %s11, 1
      %p28 = por %p26, %p27
      %p29 = scmp.ne.s32.totalorder %s21, %s24
      %p30 = scmp.eq.s32.totalorder %s11, 0
      %p31 = por %p29, %p30
      %p32 = scmp.ne.s32.totalorder %s21, %s24
      %p33 = scmp.eq.s32.totalorder %s16, 1
      %p34 = por %p32, %p33
      %p35 = scmp.ne.s32.totalorder %s24, %s25
      %p36 = scmp.eq.s32.totalorder %s16, 0
      %p37 = por %p35, %p36
      %p38 = scmp.ne.s32.totalorder %s24, %s25
      %p39 = scmp.eq.s32.totalorder %s17, 1
      %p40 = por %p38, %p39
      %p42 = scmp.ne.s32.totalorder %s25, %s41
      %p43 = scmp.eq.s32.totalorder %s17, 0
      %p44 = por %p42, %p43
      %s46 = sadd.s32 %s45, 1
      %p49 = scmp.eq.s32.totalorder %s11, 1
      %p50 = scmp.ne.s32.totalorder %s45, %s47
      %p51 = scmp.eq.s32.totalorder %s11, 0
      %p52 = por %p50, %p51
      %p53 = scmp.ne.s32.totalorder %s45, %s47
      %p54 = scmp.eq.s32.totalorder %s16, 1
      %p55 = por %p53, %p54
      %p56 = scmp.ne.s32.totalorder %s47, %s48
      %p57 = scmp.eq.s32.totalorder %s16, 0
      %p58 = por %p56, %p57
      %p59 = scmp.ne.s32.totalorder %s47, %s48
      %p60 = scmp.eq.s32.totalorder %s17, 1
      %p61 = por %p59, %p60
      %p63 = scmp.ne.s32.totalorder %s48, %s62
      %p64 = scmp.eq.s32.totalorder %s17, 0
      %p65 = por %p63, %p64
      %s66 = ssub.s32 %s11, %s18
      %p67 = scmp.eq.s32.totalorder %s66, 0
      %s69 = sadd.s32 %s68, 1
      %s70 = scalar_select %p67, %s68, %s69
      %p73 = pneg %p67
      %p74 = scmp.eq.s32.totalorder %s11, 1
      %p75 = por %p73, %p74
      %p76 = scmp.ne.s32.totalorder %s68, %s71
      %p77 = scmp.eq.s32.totalorder %s11, 0
      %p78 = por %p76, %p77
      %p79 = scmp.ne.s32.totalorder %s68, %s71
      %p80 = scmp.eq.s32.totalorder %s16, 1
      %p81 = por %p79, %p80
      %p82 = scmp.ne.s32.totalorder %s71, %s72
      %p83 = scmp.eq.s32.totalorder %s16, 0
      %p84 = por %p82, %p83
      %p85 = scmp.ne.s32.totalorder %s71, %s72
      %p86 = scmp.eq.s32.totalorder %s17, 1
      %p87 = por %p85, %p86
      %p89 = scmp.ne.s32.totalorder %s72, %s88
      %p90 = scmp.eq.s32.totalorder %s17, 0
      %p91 = por %p89, %p90
      %p92 = scmp.le.s32.totalorder 1, %s11
      %p93 = scmp.lt.s32.totalorder %s11, 3
      %p94 = pnand %p92, %p93
      %p95 = pneg %p94
      // Predicated region
      $region9: #{forward.1} parent=5 // pred_check
        _
      $region10: #{forward.1} parent=5 // pred_check_branch
        %97 = sbr.rel (%p94) target = $region12
      $region11: #{forward.1} parent=5 // pred_region
        %s98 = ssub.s32 %s11, 1
        // Predicated region
        $region13: #{forward.1} parent=11 // pred_check
          %p99 = pneg %p58
        $region14: #{forward.1} parent=11 // pred_check_branch
          %101 = sbr.rel (%p99) target = $region16
        $region15: #{forward.1} parent=11 // pred_region
          _
        $region16: #{forward.1} parent=11 // pred_fallthru
          _
      $region12: #{forward.1} parent=5 // pred_fallthru
        _
      %p102 = scmp.lt.s32.totalorder %s11, 2
      // Predicated region
      $region17: #{forward.1} parent=5 // pred_check
        %p103 = pneg %p102
      $region18: #{forward.1} parent=5 // pred_check_branch
        %105 = sbr.rel (%p103) target = $region20
      $region19: #{forward.1} parent=5 // pred_region
        // Predicated region
        $region21: #{forward.1} parent=19 // pred_check
          %p106 = pneg %p31
        $region22: #{forward.1} parent=19 // pred_check_branch
          %108 = sbr.rel (%p106) target = $region24
        $region23: #{forward.1} parent=19 // pred_region
          %s109 = smul.u32 64, %s11
          %p110 = scmp.lt.s32.totalorder %s109, 127
          %s111 = scalar_select %p110, %s109, 127
          %s112 = smul.addr %s111, 8
          %s113 = scalar_lea.vmem %s0, %s112
          %s114 = smul.u32 64, %s11
        $region24: #{forward.1} parent=19 // pred_fallthru
          _
      $region20: #{forward.1} parent=5 // pred_fallthru
        _
      %p115 = scmp.le.s32.totalorder 1, %s11
      %p116 = scmp.lt.s32.totalorder %s11, 3
      %p117 = pnand %p115, %p116
      %p118 = pneg %p117
      // Predicated region
      $region25: #{forward.1} parent=5 // pred_check
        _
      $region26: #{forward.1} parent=5 // pred_check_branch
        %120 = sbr.rel (%p117) target = $region28
      $region27: #{forward.1} parent=5 // pred_region
        %s121 = ssub.s32 %s11, 1
        %s122 = smul.u32 64, %s16
        %p123 = scmp.lt.s32.totalorder %s122, 127
        %s124 = scalar_select %p123, %s122, 127
        %s125 = smul.addr %s124, 8
        %s126 = scalar_lea.vmem %s0, %s125
        %p127 = pneg %p37
        %p128 = pneg %p34
        %p129 = pneg %p58
        %p130 = pneg %p55
        %p131 = pneg %p84
        %p132 = pneg %p81
        %s133 = sand.u32 %s71, 1
        %s134 = scalar_lea.sflag [#allocation3], %s133
        %s135 = sand.u32 %s71, 1
        %s136 = smul.addr %s135, 128
        %s137 = scalar_lea.vmem [#allocation2], %s136
        %s138 = smul.u32 64, %s16
        %p139 = scmp.lt.s32.totalorder %s138, 127
        %s140 = scalar_select %p139, %s138, 127
        %s141 = smul.addr %s140, 8
        %s142 = scalar_lea.vmem %s0, %s141
        %s143 = smul.u32 64, %s16
        %s144 = smul.u32 4, %s16
        %v145 = vld [vmem:[%s1] sm:$0xff]
        %v146 = vld [vmem:[%s1 + $0x8] sm:$0xff]
        %v147 = vld [vmem:[%s1 + $0x10] sm:$0xff]
        %v148 = vld [vmem:[%s1 + $0x18] sm:$0xff]
        %v149 = vld [vmem:[%s142] sm:$0xff]
        %v150 = vld [vmem:[%s142 + $0x8] sm:$0xff]
        %v151 = vld [vmem:[%s142 + $0x10] sm:$0xff]
        %v152 = vld [vmem:[%s142 + $0x18] sm:$0xff]
        %v153 = vld [vmem:[%s142 + $0x20] sm:$0xff]
        %v154 = vld [vmem:[%s142 + $0x28] sm:$0xff]
        %v155 = vld [vmem:[%s142 + $0x30] sm:$0xff]
        %v156 = vld [vmem:[%s142 + $0x38] sm:$0xff]
        %v157 = vld [vmem:[%s142 + $0x40] sm:$0xff]
        %v158 = vld [vmem:[%s142 + $0x48] sm:$0xff]
        %v159 = vld [vmem:[%s142 + $0x50] sm:$0xff]
        %v160 = vld [vmem:[%s142 + $0x58] sm:$0xff]
        %v161 = vld [vmem:[%s142 + $0x60] sm:$0xff]
        %v162 = vld [vmem:[%s142 + $0x68] sm:$0xff]
        %v163 = vld [vmem:[%s142 + $0x70] sm:$0xff]
        %v164 = vld [vmem:[%s142 + $0x78] sm:$0xff]
        %v165 = vld [vmem:[%s142 + $0x80] sm:$0xff]
        %v166 = vld [vmem:[%s142 + $0x88] sm:$0xff]
        %v167 = vld [vmem:[%s142 + $0x90] sm:$0xff]
        %v168 = vld [vmem:[%s142 + $0x98] sm:$0xff]
        %v169 = vld [vmem:[%s142 + $0xa0] sm:$0xff]
        %v170 = vld [vmem:[%s142 + $0xa8] sm:$0xff]
        %v171 = vld [vmem:[%s142 + $0xb0] sm:$0xff]
        %v172 = vld [vmem:[%s142 + $0xb8] sm:$0xff]
        %v173 = vld [vmem:[%s142 + $0xc0] sm:$0xff]
        %v174 = vld [vmem:[%s142 + $0xc8] sm:$0xff]
        %v175 = vld [vmem:[%s142 + $0xd0] sm:$0xff]
        %v176 = vld [vmem:[%s142 + $0xd8] sm:$0xff]
        %v177 = vld [vmem:[%s142 + $0xe0] sm:$0xff]
        %v178 = vld [vmem:[%s142 + $0xe8] sm:$0xff]
        %v179 = vld [vmem:[%s142 + $0xf0] sm:$0xff]
        %v180 = vld [vmem:[%s142 + $0xf8] sm:$0xff]
        %v181 = vld [vmem:[%s142 + $0x100] sm:$0xff]
        %v182 = vld [vmem:[%s142 + $0x108] sm:$0xff]
        %v183 = vld [vmem:[%s142 + $0x110] sm:$0xff]
        %v184 = vld [vmem:[%s142 + $0x118] sm:$0xff]
        %v185 = vld [vmem:[%s142 + $0x120] sm:$0xff]
        %v186 = vld [vmem:[%s142 + $0x128] sm:$0xff]
        %v187 = vld [vmem:[%s142 + $0x130] sm:$0xff]
        %v188 = vld [vmem:[%s142 + $0x138] sm:$0xff]
        %v189 = vld [vmem:[%s142 + $0x140] sm:$0xff]
        %v190 = vld [vmem:[%s142 + $0x148] sm:$0xff]
        %v191 = vld [vmem:[%s142 + $0x150] sm:$0xff]
        %v192 = vld [vmem:[%s142 + $0x158] sm:$0xff]
        %v193 = vld [vmem:[%s142 + $0x160] sm:$0xff]
        %v194 = vld [vmem:[%s142 + $0x168] sm:$0xff]
        %v195 = vld [vmem:[%s142 + $0x170] sm:$0xff]
        %v196 = vld [vmem:[%s142 + $0x178] sm:$0xff]
        %v197 = vld [vmem:[%s142 + $0x180] sm:$0xff]
        %v198 = vld [vmem:[%s142 + $0x188] sm:$0xff]
        %v199 = vld [vmem:[%s142 + $0x190] sm:$0xff]
        %v200 = vld [vmem:[%s142 + $0x198] sm:$0xff]
        %v201 = vld [vmem:[%s142 + $0x1a0] sm:$0xff]
        %v202 = vld [vmem:[%s142 + $0x1a8] sm:$0xff]
        %v203 = vld [vmem:[%s142 + $0x1b0] sm:$0xff]
        %v204 = vld [vmem:[%s142 + $0x1b8] sm:$0xff]
        %v205 = vld [vmem:[%s142 + $0x1c0] sm:$0xff]
        %v206 = vld [vmem:[%s142 + $0x1c8] sm:$0xff]
        %v207 = vld [vmem:[%s142 + $0x1d0] sm:$0xff]
        %v208 = vld [vmem:[%s142 + $0x1d8] sm:$0xff]
        %v209 = vld [vmem:[%s142 + $0x1e0] sm:$0xff]
        %v210 = vld [vmem:[%s142 + $0x1e8] sm:$0xff]
        %v211 = vld [vmem:[%s142 + $0x1f0] sm:$0xff]
        %v212 = vld [vmem:[%s142 + $0x1f8] sm:$0xff]
        %vm213 = vcmask 523264
        %v215 = vsel %vm213, %v145, 0
        %v218 = vsel %vm213, %v146, 0
        %v221 = vsel %vm213, %v147, 0
        %v224 = vsel %vm213, %v148, 0
        %v227 = vsel %vm213, %v149, 0
        %v230 = vsel %vm213, %v150, 0
        %v233 = vsel %vm213, %v151, 0
        %v236 = vsel %vm213, %v152, 0
        %v239 = vsel %vm213, %v153, 0
        %v242 = vsel %vm213, %v154, 0
        %v245 = vsel %vm213, %v155, 0
        %v248 = vsel %vm213, %v156, 0
        %v251 = vsel %vm213, %v157, 0
        %v254 = vsel %vm213, %v158, 0
        %v257 = vsel %vm213, %v159, 0
        %v260 = vsel %vm213, %v160, 0
        %v263 = vsel %vm213, %v161, 0
        %v266 = vsel %vm213, %v162, 0
        %v269 = vsel %vm213, %v163, 0
        %v272 = vsel %vm213, %v164, 0
        %v275 = vsel %vm213, %v165, 0
        %v278 = vsel %vm213, %v166, 0
        %v281 = vsel %vm213, %v167, 0
        %v284 = vsel %vm213, %v168, 0
        %v287 = vsel %vm213, %v169, 0
        %v290 = vsel %vm213, %v170, 0
        %v293 = vsel %vm213, %v171, 0
        %v296 = vsel %vm213, %v172, 0
        %v299 = vsel %vm213, %v173, 0
        %v302 = vsel %vm213, %v174, 0
        %v305 = vsel %vm213, %v175, 0
        %v308 = vsel %vm213, %v176, 0
        %v311 = vsel %vm213, %v177, 0
        %v314 = vsel %vm213, %v178, 0
        %v317 = vsel %vm213, %v179, 0
        %v320 = vsel %vm213, %v180, 0
        %v323 = vsel %vm213, %v181, 0
        %v326 = vsel %vm213, %v182, 0
        %v329 = vsel %vm213, %v183, 0
        %v332 = vsel %vm213, %v184, 0
        %v335 = vsel %vm213, %v185, 0
        %v338 = vsel %vm213, %v186, 0
        %v341 = vsel %vm213, %v187, 0
        %v344 = vsel %vm213, %v188, 0
        %v347 = vsel %vm213, %v189, 0
        %v350 = vsel %vm213, %v190, 0
        %v353 = vsel %vm213, %v191, 0
        %v356 = vsel %vm213, %v192, 0
        %v359 = vsel %vm213, %v193, 0
        %v362 = vsel %vm213, %v194, 0
        %v365 = vsel %vm213, %v195, 0
        %v368 = vsel %vm213, %v196, 0
        %v371 = vsel %vm213, %v197, 0
        %v374 = vsel %vm213, %v198, 0
        %v377 = vsel %vm213, %v199, 0
        %v380 = vsel %vm213, %v200, 0
        %v383 = vsel %vm213, %v201, 0
        %v386 = vsel %vm213, %v202, 0
        %v389 = vsel %vm213, %v203, 0
        %v392 = vsel %vm213, %v204, 0
        %v395 = vsel %vm213, %v205, 0
        %v398 = vsel %vm213, %v206, 0
        %v401 = vsel %vm213, %v207, 0
        %v404 = vsel %vm213, %v208, 0
        %v407 = vsel %vm213, %v209, 0
        %v410 = vsel %vm213, %v210, 0
        %v413 = vsel %vm213, %v211, 0
        %v416 = vsel %vm213, %v212, 0
        %418 = vmatprep.subr.mxu0 0.0
        %419 = vmatpush1.xpose.msra.mxu0 %v227
        %420 = vmatprep.subr.mxu0 0.0
        %421 = vmatpush1.xpose.msra.mxu0 %v230
        %422 = vmatprep.subr.mxu0 0.0
        %423 = vmatpush1.xpose.msra.mxu0 %v233
        %424 = vmatprep.subr.mxu0 0.0
        %425 = vmatpush1.xpose.msra.mxu0 %v236
        %426 = vmatprep.subr.mxu0 0.0
        %427 = vmatpush1.xpose.msra.mxu0 %v239
        %428 = vmatprep.subr.mxu0 0.0
        %429 = vmatpush1.xpose.msra.mxu0 %v242
        %430 = vmatprep.subr.mxu0 0.0
        %431 = vmatpush1.xpose.msra.mxu0 %v245
        %432 = vmatprep.subr.mxu0 0.0
        %433 = vmatpush1.xpose.msra.mxu0 %v248
        %434 = vmatprep.subr.mxu0 0.0
        %435 = vmatpush1.xpose.msra.mxu0 %v251
        %436 = vmatprep.subr.mxu0 0.0
        %437 = vmatpush1.xpose.msra.mxu0 %v254
        %438 = vmatprep.subr.mxu0 0.0
        %439 = vmatpush1.xpose.msra.mxu0 %v257
        %440 = vmatprep.subr.mxu0 0.0
        %441 = vmatpush1.xpose.msra.mxu0 %v260
        %442 = vmatprep.subr.mxu0 0.0
        %443 = vmatpush1.xpose.msra.mxu0 %v263
        %444 = vmatprep.subr.mxu0 0.0
        %445 = vmatpush1.xpose.msra.mxu0 %v266
        %446 = vmatprep.subr.mxu0 0.0
        %447 = vmatpush1.xpose.msra.mxu0 %v269
        %448 = vmatprep.subr.mxu0 0.0
        %449 = vmatpush1.xpose.msra.mxu0 %v272
        %450 = vmatprep.subr.mxu0 0.0
        %451 = vmatpush1.xpose.msra.mxu0 %v275
        %452 = vmatprep.subr.mxu0 0.0
        %453 = vmatpush1.xpose.msra.mxu0 %v278
        %454 = vmatprep.subr.mxu0 0.0
        %455 = vmatpush1.xpose.msra.mxu0 %v281
        %456 = vmatprep.subr.mxu0 0.0
        %457 = vmatpush1.xpose.msra.mxu0 %v284
        %458 = vmatprep.subr.mxu0 0.0
        %459 = vmatpush1.xpose.msra.mxu0 %v287
        %460 = vmatprep.subr.mxu0 0.0
        %461 = vmatpush1.xpose.msra.mxu0 %v290
        %462 = vmatprep.subr.mxu0 0.0
        %463 = vmatpush1.xpose.msra.mxu0 %v293
        %464 = vmatprep.subr.mxu0 0.0
        %465 = vmatpush1.xpose.msra.mxu0 %v296
        %466 = vmatprep.subr.mxu0 0.0
        %467 = vmatpush1.xpose.msra.mxu0 %v299
        %468 = vmatprep.subr.mxu0 0.0
        %469 = vmatpush1.xpose.msra.mxu0 %v302
        %470 = vmatprep.subr.mxu0 0.0
        %471 = vmatpush1.xpose.msra.mxu0 %v305
        %472 = vmatprep.subr.mxu0 0.0
        %473 = vmatpush1.xpose.msra.mxu0 %v308
        %474 = vmatprep.subr.mxu0 0.0
        %475 = vmatpush1.xpose.msra.mxu0 %v311
        %476 = vmatprep.subr.mxu0 0.0
        %477 = vmatpush1.xpose.msra.mxu0 %v314
        %478 = vmatprep.subr.mxu0 0.0
        %479 = vmatpush1.xpose.msra.mxu0 %v317
        %480 = vmatprep.subr.mxu0 0.0
        %481 = vmatpush1.xpose.msra.mxu0 %v320
        %482 = vmatprep.mubr.f32.mxu0 0.0
        %483 = vmatmul.mubr.f32.gmra.mrb[0].mxu0 %v215
        %v484 = vpop.f32.mrb[0].mxu0
        %v485 = vadd.f32 0.0, %v484
        %v486 = vpop.f32.mrb[0].mxu0
        %v487 = vadd.f32 0.0, %v486
        %488 = vmatprep.mubr.f32.mxu0 0.0
        %489 = vmatmul.mubr.f32.gmra.mrb[0].mxu0 %v218
        %v490 = vpop.f32.mrb[0].mxu0
        %v491 = vadd.f32 0.0, %v490
        %v492 = vpop.f32.mrb[0].mxu0
        %v493 = vadd.f32 0.0, %v492
        %494 = vmatprep.mubr.f32.mxu0 0.0
        %495 = vmatmul.mubr.f32.gmra.mrb[0].mxu0 %v221
        %v496 = vpop.f32.mrb[0].mxu0
        %v497 = vadd.f32 0.0, %v496
        %v498 = vpop.f32.mrb[0].mxu0
        %v499 = vadd.f32 0.0, %v498
        %500 = vmatprep.mubr.f32.mxu0 0.0
        %501 = vmatmul.mubr.f32.gmra.mrb[0].mxu0 %v224
        %v502 = vpop.f32.mrb[0].mxu0
        %v503 = vadd.f32 0.0, %v502
        %v504 = vpop.f32.mrb[0].mxu0
        %v505 = vadd.f32 0.0, %v504
        %506 = vdwg.mxu0
        %507 = vmatprep.subr.mxu0 0.0
        %508 = vmatpush1.xpose.msra.mxu0 %v323
        %509 = vmatprep.subr.mxu0 0.0
        %510 = vmatpush1.xpose.msra.mxu0 %v326
        %511 = vmatprep.subr.mxu0 0.0
        %512 = vmatpush1.xpose.msra.mxu0 %v329
        %513 = vmatprep.subr.mxu0 0.0
        %514 = vmatpush1.xpose.msra.mxu0 %v332
        %515 = vmatprep.subr.mxu0 0.0
        %516 = vmatpush1.xpose.msra.mxu0 %v335
        %517 = vmatprep.subr.mxu0 0.0
        %518 = vmatpush1.xpose.msra.mxu0 %v338
        %519 = vmatprep.subr.mxu0 0.0
        %520 = vmatpush1.xpose.msra.mxu0 %v341
        %521 = vmatprep.subr.mxu0 0.0
        %522 = vmatpush1.xpose.msra.mxu0 %v344
        %523 = vmatprep.subr.mxu0 0.0
        %524 = vmatpush1.xpose.msra.mxu0 %v347
        %525 = vmatprep.subr.mxu0 0.0
        %526 = vmatpush1.xpose.msra.mxu0 %v350
        %527 = vmatprep.subr.mxu0 0.0
        %528 = vmatpush1.xpose.msra.mxu0 %v353
        %529 = vmatprep.subr.mxu0 0.0
        %530 = vmatpush1.xpose.msra.mxu0 %v356
        %531 = vmatprep.subr.mxu0 0.0
        %532 = vmatpush1.xpose.msra.mxu0 %v359
        %533 = vmatprep.subr.mxu0 0.0
        %534 = vmatpush1.xpose.msra.mxu0 %v362
        %535 = vmatprep.subr.mxu0 0.0
        %536 = vmatpush1.xpose.msra.mxu0 %v365
        %537 = vmatprep.subr.mxu0 0.0
        %538 = vmatpush1.xpose.msra.mxu0 %v368
        %539 = vmatprep.subr.mxu0 0.0
        %540 = vmatpush1.xpose.msra.mxu0 %v371
        %541 = vmatprep.subr.mxu0 0.0
        %542 = vmatpush1.xpose.msra.mxu0 %v374
        %543 = vmatprep.subr.mxu0 0.0
        %544 = vmatpush1.xpose.msra.mxu0 %v377
        %545 = vmatprep.subr.mxu0 0.0
        %546 = vmatpush1.xpose.msra.mxu0 %v380
        %547 = vmatprep.subr.mxu0 0.0
        %548 = vmatpush1.xpose.msra.mxu0 %v383
        %549 = vmatprep.subr.mxu0 0.0
        %550 = vmatpush1.xpose.msra.mxu0 %v386
        %551 = vmatprep.subr.mxu0 0.0
        %552 = vmatpush1.xpose.msra.mxu0 %v389
        %553 = vmatprep.subr.mxu0 0.0
        %554 = vmatpush1.xpose.msra.mxu0 %v392
        %555 = vmatprep.subr.mxu0 0.0
        %556 = vmatpush1.xpose.msra.mxu0 %v395
        %557 = vmatprep.subr.mxu0 0.0
        %558 = vmatpush1.xpose.msra.mxu0 %v398
        %559 = vmatprep.subr.mxu0 0.0
        %560 = vmatpush1.xpose.msra.mxu0 %v401
        %561 = vmatprep.subr.mxu0 0.0
        %562 = vmatpush1.xpose.msra.mxu0 %v404
        %563 = vmatprep.subr.mxu0 0.0
        %564 = vmatpush1.xpose.msra.mxu0 %v407
        %565 = vmatprep.subr.mxu0 0.0
        %566 = vmatpush1.xpose.msra.mxu0 %v410
        %567 = vmatprep.subr.mxu0 0.0
        %568 = vmatpush1.xpose.msra.mxu0 %v413
        %569 = vmatprep.subr.mxu0 0.0
        %570 = vmatpush1.xpose.msra.mxu0 %v416
        %571 = vmatprep.mubr.f32.mxu0 0.0
        %572 = vmatmul.mubr.f32.gmra.mrb[0].mxu0 %v215
        %v573 = vpop.f32.mrb[0].mxu0
        %v574 = vadd.f32 0.0, %v573
        %v575 = vpop.f32.mrb[0].mxu0
        %v576 = vadd.f32 0.0, %v575
        %577 = vmatprep.mubr.f32.mxu0 0.0
        %578 = vmatmul.mubr.f32.gmra.mrb[0].mxu0 %v218
        %v579 = vpop.f32.mrb[0].mxu0
        %v580 = vadd.f32 0.0, %v579
        %v581 = vpop.f32.mrb[0].mxu0
        %v582 = vadd.f32 0.0, %v581
        %583 = vmatprep.mubr.f32.mxu0 0.0
        %584 = vmatmul.mubr.f32.gmra.mrb[0].mxu0 %v221
        %v585 = vpop.f32.mrb[0].mxu0
        %v586 = vadd.f32 0.0, %v585
        %v587 = vpop.f32.mrb[0].mxu0
        %v588 = vadd.f32 0.0, %v587
        %589 = vmatprep.mubr.f32.mxu0 0.0
        %590 = vmatmul.mubr.f32.gmra.mrb[0].mxu0 %v224
        %v591 = vpop.f32.mrb[0].mxu0
        %v592 = vadd.f32 0.0, %v591
        %v593 = vpop.f32.mrb[0].mxu0
        %v594 = vadd.f32 0.0, %v593
        %595 = vdwg.mxu0
        %v596 = vmul.f32 %v485, %v485
        %v597 = vmul.f32 %v487, %v487
        %v598 = vmul.f32 %v574, %v574
        %v599 = vmul.f32 %v576, %v576
        %v600 = vmul.f32 %v491, %v491
        %v601 = vmul.f32 %v493, %v493
        %v602 = vmul.f32 %v580, %v580
        %v603 = vmul.f32 %v582, %v582
        %v604 = vmul.f32 %v497, %v497
        %v605 = vmul.f32 %v499, %v499
        %v606 = vmul.f32 %v586, %v586
        %v607 = vmul.f32 %v588, %v588
        %v608 = vmul.f32 %v503, %v503
        %v609 = vmul.f32 %v505, %v505
        %v610 = vmul.f32 %v592, %v592
        %v611 = vmul.f32 %v594, %v594
        %v612 = vadd.f32 %v596, %v600
        %v613 = vadd.f32 %v612, %v604
        %v614 = vadd.f32 %v613, %v608
        %v615 = vrot.slane %v614, 4
        %v616 = vadd.f32 %v614, %v615
        %v617 = vrot.slane %v616, 2
        %v618 = vadd.f32 %v616, %v617
        %v619 = vrot.slane %v618, 1
        %v620 = vadd.f32 %v618, %v619
        %v621 = vadd.f32 %v597, %v601
        %v622 = vadd.f32 %v621, %v605
        %v623 = vadd.f32 %v622, %v609
        %v624 = vrot.slane %v623, 4
        %v625 = vadd.f32 %v623, %v624
        %v626 = vrot.slane %v625, 2
        %v627 = vadd.f32 %v625, %v626
        %v628 = vrot.slane %v627, 1
        %v629 = vadd.f32 %v627, %v628
        %v630 = vadd.f32 %v598, %v602
        %v631 = vadd.f32 %v630, %v606
        %v632 = vadd.f32 %v631, %v610
        %v633 = vrot.slane %v632, 4
        %v634 = vadd.f32 %v632, %v633
        %v635 = vrot.slane %v634, 2
        %v636 = vadd.f32 %v634, %v635
        %v637 = vrot.slane %v636, 1
        %v638 = vadd.f32 %v636, %v637
        %v639 = vadd.f32 %v599, %v603
        %v640 = vadd.f32 %v639, %v607
        %v641 = vadd.f32 %v640, %v611
        %v642 = vrot.slane %v641, 4
        %v643 = vadd.f32 %v641, %v642
        %v644 = vrot.slane %v643, 2
        %v645 = vadd.f32 %v643, %v644
        %v646 = vrot.slane %v645, 1
        %v647 = vadd.f32 %v645, %v646
        %v648 = vmax.f32 %v620, 1e-24
        %v649 = vmax.f32 %v629, 1e-24
        %v650 = vmax.f32 %v638, 1e-24
        %v651 = vmax.f32 %v647, 1e-24
        %v652 = vrsqrt.pop %v648
        %v653 = vrsqrt.pop %v649
        %v654 = vrsqrt.pop %v650
        %v655 = vrsqrt.pop %v651
        %v656 = vmul.f32 %v485, %v652
        %v657 = vmul.f32 %v487, %v653
        %v658 = vmul.f32 %v574, %v654
        %v659 = vmul.f32 %v576, %v655
        %v660 = vmul.f32 %v491, %v652
        %v661 = vmul.f32 %v493, %v653
        %v662 = vmul.f32 %v580, %v654
        %v663 = vmul.f32 %v582, %v655
        %v664 = vmul.f32 %v497, %v652
        %v665 = vmul.f32 %v499, %v653
        %v666 = vmul.f32 %v586, %v654
        %v667 = vmul.f32 %v588, %v655
        %v668 = vmul.f32 %v503, %v652
        %v669 = vmul.f32 %v505, %v653
        %v670 = vmul.f32 %v592, %v654
        %v671 = vmul.f32 %v594, %v655
        %672 = vst [vmem:[%s137] sm:$0xff] %v656
        %673 = vst [vmem:[%s137 + $0x8] sm:$0xff] %v657
        %674 = vst [vmem:[%s137 + $0x10] sm:$0xff] %v658
        %675 = vst [vmem:[%s137 + $0x18] sm:$0xff] %v659
        %676 = vst [vmem:[%s137 + $0x20] sm:$0xff] %v660
        %677 = vst [vmem:[%s137 + $0x28] sm:$0xff] %v661
        %678 = vst [vmem:[%s137 + $0x30] sm:$0xff] %v662
        %679 = vst [vmem:[%s137 + $0x38] sm:$0xff] %v663
        %680 = vst [vmem:[%s137 + $0x40] sm:$0xff] %v664
        %681 = vst [vmem:[%s137 + $0x48] sm:$0xff] %v665
        %682 = vst [vmem:[%s137 + $0x50] sm:$0xff] %v666
        %683 = vst [vmem:[%s137 + $0x58] sm:$0xff] %v667
        %684 = vst [vmem:[%s137 + $0x60] sm:$0xff] %v668
        %685 = vst [vmem:[%s137 + $0x68] sm:$0xff] %v669
        %686 = vst [vmem:[%s137 + $0x70] sm:$0xff] %v670
        %687 = vst [vmem:[%s137 + $0x78] sm:$0xff] %v671
        %s688 = sand.u32 %s71, 1
        %s689 = scalar_lea.sflag [#allocation3], %s688
        %s690 = sand.u32 %s71, 1
        %s691 = smul.addr %s690, 128
        %s692 = scalar_lea.vmem [#allocation2], %s691
        // Predicated region
        $region29: #{forward.1} parent=27 // pred_check
          %p693 = pneg %p81
        $region30: #{forward.1} parent=27 // pred_check_branch
          %695 = sbr.rel (%p693) target = $region32
        $region31: #{forward.1} parent=27 // pred_region
          %s696 = smul.u32 4, %s16
          %s698 = ssub.s32 2048, 2048
          %699 = vsyncadd %s689, %s698
          %s700 = smul.addr %s696, 128
          %s701 = scalar_lea.hbm %s2, %s700
          %s702 = sshll.u32 %s692, 4
          %s703 = int_to_ptr.vmem [resolvable:$true] %s702
          %708 = dma.vmem_to_hbm [thread:$0]  %s703, 2048, %s701, %s689, 512, 1024, 32
        $region32: #{forward.1} parent=27 // pred_fallthru
          _
      $region28: #{forward.1} parent=5 // pred_fallthru
        _
      %p709 = scmp.le.s32.totalorder 2, %s11
      // Predicated region
      $region33: #{forward.1} parent=5 // pred_check
        %p710 = pneg %p709
      $region34: #{forward.1} parent=5 // pred_check_branch
        %712 = sbr.rel (%p710) target = $region36
      $region35: #{forward.1} parent=5 // pred_region
        %s713 = ssub.s32 %s11, 2
        // Predicated region
        $region37: #{forward.1} parent=35 // pred_check
          %p714 = pneg %p87
        $region38: #{forward.1} parent=35 // pred_check_branch
          %716 = sbr.rel (%p714) target = $region40
        $region39: #{forward.1} parent=35 // pred_region
          %s717 = sand.u32 %s72, 1
          %s718 = scalar_lea.sflag [#allocation3], %s717
          %s719 = sand.u32 %s72, 1
          %s720 = smul.addr %s719, 128
          %s721 = scalar_lea.vmem [#allocation2], %s720
          %722 = dma.done %s718, 2048
        $region40: #{forward.1} parent=35 // pred_fallthru
          _
      $region36: #{forward.1} parent=5 // pred_fallthru
        _
    $region6: #{forward.1} parent=1 // loop_footer
      %s15 = sadd.s32 1, %s11
    $region7: #{forward.1} parent=1 // loop_footer_branch
      %10 = sbr.rel target = $region3
    $region8: #{forward.1} parent=1 // loop_exit
      _
    %723 = vsyncpa [#allocation3], 1
    %s724 = scalar_lea.sflag [#allocation3], 1
    %725 = vsyncpa %s724, 1

</llo_original>
